<compile_context>
chip_gen: v7x
topology: tpu7x:2x2x1
jax: 0.10.0
libtpu: 0.0.40
codegen_flags: <defaults>
</compile_context>

<pallas_src>
import functools
import math

import jax
import jax.numpy as jnp
from jax.experimental import pallas as pl
from jax.experimental.pallas import tpu as pltpu


def _round_up(x, m):
    return ((x + m - 1) // m) * m


def _align_feature(d):
    # 256-wide operands fill the 256x256 MXUs on v6e/v7x; 128 remains the right
    # quantum for smaller dims and for v5e's 128x128 MXUs.
    return _round_up(d, 256) if d >= 256 else _round_up(d, 128)


# -----------------------------------------------------------------------------
# Fused kernel: refs = (x, w0, b0, w1, b1, ..., wN-1, bN-1, out)
#   x   : [tb, Din_pad]            (any float dtype; cast to bf16 on-chip)
#   w_i : [Din_pad_i, Dout_pad_i]  bf16  (pre-transposed, zero padded)
#   b_i : [1, Dout_pad_i]          f32
#   out : [tb, Dout_last_pad]      out_dtype
# -----------------------------------------------------------------------------
def _stacked_kernel(*refs, n_layers, activations):
    x_ref = refs[0]
    o_ref = refs[-1]

    # Activation stays on-chip for the whole stack. Cast to bf16 for the MXU.
    h = x_ref[...].astype(jnp.bfloat16)
    for i in range(n_layers):
        w = refs[1 + 2 * i][...]   # bf16 [Din_pad, Dout_pad]
        b = refs[2 + 2 * i][...]   # f32  [1, Dout_pad]
        # MXU matmul with f32 accumulation; bias + activation fused in f32.
        y = jnp.dot(h, w, preferred_element_type=jnp.float32)
        y = y + b
        act = activations[i]
        if act == "tanh":
            y = jnp.tanh(y)            # EUP
        elif act == "relu":
            y = jnp.maximum(y, 0.0)    # VPU
        elif act is not None:
            raise ValueError(f"unsupported activation: {act}")
        if i < n_layers - 1:
            h = y.astype(jnp.bfloat16)   # feed next layer's MXU in bf16
        else:
            o_ref[...] = y.astype(o_ref.dtype)


# -----------------------------------------------------------------------------
# Parameter init (PyTorch convention: W is [Dout, Din], zero bias) + one-time
# prep (pad to MXU-friendly alignment, transpose to [Din, Dout], cast to bf16).
# -----------------------------------------------------------------------------
def xavier_uniform(key, out_dim, in_dim, dtype=jnp.float32):
    bound = math.sqrt(6.0 / (in_dim + out_dim))
    return jax.random.uniform(key, (out_dim, in_dim), dtype=dtype,
                              minval=-bound, maxval=bound)


def init_stacked_dense(key, in_dimension, units):
    dims = [in_dimension] + list(units)
    params = []
    for i in range(1, len(dims)):
        key, wk = jax.random.split(key)
        w = xavier_uniform(wk, dims[i], dims[i - 1])
        b = jnp.zeros((dims[i],), dtype=jnp.float32)
        params.append((w, b))
    return params


def prepare_params(params, in_dimension):
    """One-time: zero-pad feature dims (128-aligned, 256 for dims >= 256),
    transpose W -> [Din, Dout], cast W to bf16, bias stays f32."""
    prepped = []
    din = in_dimension
    for w, b in params:
        dout, din_w = w.shape
        assert din_w == din
        din_p, dout_p = _align_feature(din), _align_feature(dout)
        w_t = jnp.zeros((din_p, dout_p), dtype=jnp.bfloat16)
        w_t = w_t.at[:din, :dout].set(w.T.astype(jnp.bfloat16))
        b_p = jnp.zeros((1, dout_p), dtype=jnp.float32)
        b_p = b_p.at[:, :dout].set(b.astype(jnp.float32))
        prepped.append((w_t, b_p, dout))
        din = dout
    return prepped


# -----------------------------------------------------------------------------
# Fused forward pass.
# -----------------------------------------------------------------------------
def stacked_dense_forward(x, prepped, activation_fns, *, batch_tile=None,
                          out_dtype=jnp.float32, single_buffer_weights=True,
                          x_buffer_count=2):
    B, din = x.shape
    n_layers = len(prepped)
    assert n_layers == len(activation_fns)
    for act in activation_fns:
        # Zero-padding correctness relies on act(0) == 0 (tanh / relu / None).
        assert act in ("tanh", "relu", None), f"unsupported activation {act}"

    din_p = prepped[0][0].shape[0]
    dout_last = prepped[-1][2]
    dout_last_p = prepped[-1][0].shape[1]

    # --- Batch tile: multiple of 16 (bf16 sublane packing), large enough to
    # amortize ~0.35us/step overhead, and >=2 grid steps when the batch allows
    # so v7x's two TensorCores both get work under dimension_semantics.
    b16 = _round_up(B, 16)
    if batch_tile is None:
        tb = min(512, b16)
        if b16 >= 32:
            nsteps = max(pl.cdiv(b16, tb), 2)
            tb = _round_up(pl.cdiv(b16, nsteps), 16)
    else:
        tb = _round_up(batch_tile, 16)
    b_pad = _round_up(B, tb)
    grid = (b_pad // tb,)

    # --- x: skip the host-side padded copy (an extra HBM read+write of x) when
    # no padding is needed; the kernel casts to bf16 on-chip.
    if B % tb == 0 and din == din_p:
        x_in = x
    else:
        x_p = jnp.zeros((b_pad, din_p), dtype=jnp.bfloat16)
        x_in = x_p.at[:B, :din].set(x.astype(jnp.bfloat16))
    x_itemsize = jnp.dtype(x_in.dtype).itemsize
    out_itemsize = jnp.dtype(out_dtype).itemsize

    flat_inputs = [x_in]
    flops = 0
    transcendentals = 0
    weight_bytes = 0
    for (w_t, b_p, _), act in zip(prepped, activation_fns):
        dk, nk = w_t.shape
        flat_inputs += [w_t, b_p]
        flops += 2 * b_pad * dk * nk
        weight_bytes += w_t.size * 2 + b_p.size * 4
        if act == "tanh":
            transcendentals += b_pad * nk

    bytes_accessed = (b_pad * din_p * x_itemsize
                      + b_pad * dout_last_p * out_itemsize
                      + weight_bytes)

    # --- Explicit VMEM budget -> vmem_limit_bytes (scoped defaults: 16 MiB on
    # v5e, 32 MiB on v6e/v7x). Budget conservatively with double-buffered
    # weights in case the single-buffer request is not honored.
    x_tile_bytes = tb * din_p * x_itemsize
    out_tile_bytes = tb * dout_last_p * out_itemsize
    inter_bytes = 4 * tb * max(w.shape[1] for w, _, _ in prepped)  # f32 headroom
    vmem_budget = (2 * weight_bytes + max(x_buffer_count, 2) * x_tile_bytes
                   + 2 * out_tile_bytes + 2 * inter_bytes)
    vmem_limit = int(min(max(int(vmem_budget * 1.25) + (2 << 20), 32 << 20),
                         112 << 20))
    # TODO(synk): if `weight_bytes` alone exceeds ~48 MiB, switch to a K/N-tiled
    # accumulator path instead of whole-weight residency (mandatory on v7x).

    kernel = functools.partial(
        _stacked_kernel, n_layers=n_layers, activations=tuple(activation_fns))

    def _bspec(shape, index_map, pipeline_mode=None):
        if pipeline_mode is None:
            return pl.BlockSpec(shape, index_map)
        return pl.BlockSpec(shape, index_map, pipeline_mode=pipeline_mode)

    x_pm = None if x_buffer_count == 2 else pl.Buffered(x_buffer_count)

    def _build(weight_pm):
        in_specs = [_bspec((tb, din_p), lambda i: (i, 0), x_pm)]
        for (w_t, b_p, _) in prepped:
            dk, nk = w_t.shape
            # Constant block index -> weights/bias stay VMEM-resident across
            # grid steps; single-buffered (Buffered(1)) to halve their footprint.
            in_specs.append(_bspec((dk, nk), lambda i: (0, 0), weight_pm))
            in_specs.append(_bspec((1, nk), lambda i: (0, 0), weight_pm))
        return pl.pallas_call(
            kernel,
            out_shape=jax.ShapeDtypeStruct((b_pad, dout_last_p), out_dtype),
            grid=grid,
            in_specs=in_specs,
            out_specs=pl.BlockSpec((tb, dout_last_p), lambda i: (i, 0)),
            compiler_params=pltpu.CompilerParams(
                dimension_semantics=("parallel",),  # batch axis -> 2 TCs on v7x
                vmem_limit_bytes=vmem_limit,
            ),
            cost_estimate=pl.CostEstimate(
                flops=flops,
                transcendentals=transcendentals,
                bytes_accessed=bytes_accessed,
            ),
        )

    attempts = [pl.Buffered(1), None] if single_buffer_weights else [None]
    out_p = None
    last_err = None
    for weight_pm in attempts:
        try:
            out_p = jax.block_until_ready(_build(weight_pm)(*flat_inputs))
            break
        except Exception as e:  # fall back to default double buffering
            last_err = e
            out_p = None
    if out_p is None:
        raise last_err

    if b_pad == B and dout_last_p == dout_last:
        return out_p          # no host-side slice needed
    return out_p[:B, :dout_last]


# -----------------------------------------------------------------------------
# References for correctness checking.
# -----------------------------------------------------------------------------
def _reference_bf16(x, params, activation_fns):
    """Same numerics as the kernel: bf16 MXU inputs, f32 accumulate/epilogue."""
    n = len(params)
    h = x.astype(jnp.bfloat16)
    for idx, ((w, b), act) in enumerate(zip(params, activation_fns)):
        y = jnp.dot(h, w.T.astype(jnp.bfloat16),
                    preferred_element_type=jnp.float32) + b
        if act == "tanh":
            y = jnp.tanh(y)
        elif act == "relu":
            y = jnp.maximum(y, 0.0)
        h = y.astype(jnp.bfloat16) if idx < n - 1 else y
    return h


def _reference_f32(x, params, activation_fns):
    """Full-precision PyTorch-equivalent reference."""
    h = x
    for (w, b), act in zip(params, activation_fns):
        h = h @ w.T + b
        if act == "tanh":
            h = jnp.tanh(h)
        elif act == "relu":
            h = jnp.maximum(h, 0.0)
    return h


if __name__ == "__main__":
    key = jax.random.PRNGKey(0)

    # StackedDense(in_dimension=32, units=(64, 32), activation_fns=(nn.Tanh, None))
    in_dimension = 32
    units = (64, 32)
    activation_fns = ("tanh", None)

    key, pkey, xkey = jax.random.split(key, 3)
    params = init_stacked_dense(pkey, in_dimension, units)
    prepped = prepare_params(params, in_dimension)

    batch = 8
    x = jax.random.normal(xkey, (batch, in_dimension), dtype=jnp.float32)

    out = stacked_dense_forward(x, prepped, activation_fns)
    out = jax.block_until_ready(out)
    assert out.shape == (batch, units[-1])

    # Tight check against a bf16-matched pure-JAX reference.
    ref_bf16 = _reference_bf16(x, params, activation_fns)
    assert jnp.allclose(out, ref_bf16, atol=2e-3, rtol=2e-3), (
        float(jnp.max(jnp.abs(out - ref_bf16)))
    )
    # Loose check against the full-f32 PyTorch-equivalent reference.
    ref_f32 = _reference_f32(x, params, activation_fns)
    assert jnp.allclose(out, ref_f32, atol=5e-2, rtol=5e-2), (
        float(jnp.max(jnp.abs(out - ref_f32)))
    )

    print("KERNEL_OK")
</pallas_src>

<mosaic_0001>
module attributes {stable_mosaic.version = 11 : i64} {
  func.func @_stacked_kernel(%arg0: i32, %arg1: memref<16x128xbf16, #tpu.memory_space<vmem>>, %arg2: memref<128x128xbf16, #tpu.memory_space<vmem>>, %arg3: memref<1x128xf32, #tpu.memory_space<vmem>>, %arg4: memref<128x128xbf16, #tpu.memory_space<vmem>>, %arg5: memref<1x128xf32, #tpu.memory_space<vmem>>, %arg6: memref<16x128xf32, #tpu.memory_space<vmem>>) attributes {dimension_semantics = [#tpu.dimension_semantics<parallel>], iteration_bounds = array<i64: 1>, scalar_prefetch = 0 : i64, scratch_operands = 0 : i64, tpu.core_type = #tpu.core_type<tc>, window_params = [{transform_indices = @transform_0, window_bounds = array<i64: 16, 128>}, {pipeline_mode = #tpu.pipeline_mode<synchronous>, transform_indices = @transform_1, window_bounds = array<i64: 128, 128>}, {pipeline_mode = #tpu.pipeline_mode<synchronous>, transform_indices = @transform_2, window_bounds = array<i64: 1, 128>}, {pipeline_mode = #tpu.pipeline_mode<synchronous>, transform_indices = @transform_3, window_bounds = array<i64: 128, 128>}, {pipeline_mode = #tpu.pipeline_mode<synchronous>, transform_indices = @transform_4, window_bounds = array<i64: 1, 128>}, {transform_indices = @transform_5, window_bounds = array<i64: 16, 128>}]} {
    %c0 = arith.constant 0 : index
    %c0_0 = arith.constant 0 : index
    %0 = vector.load %arg1[%c0, %c0_0] : memref<16x128xbf16, #tpu.memory_space<vmem>>, vector<16x128xbf16>
    %c0_1 = arith.constant 0 : index
    %c0_2 = arith.constant 0 : index
    %1 = vector.load %arg2[%c0_1, %c0_2] : memref<128x128xbf16, #tpu.memory_space<vmem>>, vector<128x128xbf16>
    %c0_3 = arith.constant 0 : index
    %c0_4 = arith.constant 0 : index
    %2 = vector.load %arg3[%c0_3, %c0_4] : memref<1x128xf32, #tpu.memory_space<vmem>>, vector<1x128xf32>
    %cst = arith.constant dense<0.000000e+00> : vector<16x128xf32>
    %3 = tpu.matmul %0, %1, %cst {dimension_numbers = #tpu.dot_dimension_numbers<[1], [0], [0], [1], [0, 0, 1, 1], [], []>} : vector<16x128xbf16>, vector<128x128xbf16>, vector<16x128xf32> -> vector<16x128xf32>
    %4 = vector.broadcast %2 : vector<1x128xf32> to vector<16x128xf32>
    %5 = arith.addf %3, %4 : vector<16x128xf32>
    %6 = math.tanh %5 : vector<16x128xf32>
    %7 = arith.truncf %6 : vector<16x128xf32> to vector<16x128xbf16>
    %c0_5 = arith.constant 0 : index
    %c0_6 = arith.constant 0 : index
    %8 = vector.load %arg4[%c0_5, %c0_6] : memref<128x128xbf16, #tpu.memory_space<vmem>>, vector<128x128xbf16>
    %c0_7 = arith.constant 0 : index
    %c0_8 = arith.constant 0 : index
    %9 = vector.load %arg5[%c0_7, %c0_8] : memref<1x128xf32, #tpu.memory_space<vmem>>, vector<1x128xf32>
    %cst_9 = arith.constant dense<0.000000e+00> : vector<16x128xf32>
    %10 = tpu.matmul %7, %8, %cst_9 {dimension_numbers = #tpu.dot_dimension_numbers<[1], [0], [0], [1], [0, 0, 1, 1], [], []>} : vector<16x128xbf16>, vector<128x128xbf16>, vector<16x128xf32> -> vector<16x128xf32>
    %11 = vector.broadcast %9 : vector<1x128xf32> to vector<16x128xf32>
    %12 = arith.addf %10, %11 : vector<16x128xf32>
    %c0_10 = arith.constant 0 : index
    %c0_11 = arith.constant 0 : index
    %13 = vector.load %arg6[%c0_10, %c0_11] : memref<16x128xf32, #tpu.memory_space<vmem>>, vector<16x128xf32>
    tpu.vector_store %arg6[%c0_10, %c0_11], %12 {strides = array<i32>} : memref<16x128xf32, #tpu.memory_space<vmem>>, vector<16x128xf32>,
    return
  }
  func.func @transform_0(%arg0: i32) -> (i32, i32) {
    %c0_i32 = arith.constant 0 : i32
    %c0_i32_0 = arith.constant 0 : i32
    return %arg0, %c0_i32 : i32, i32
  }
  func.func @transform_1(%arg0: i32) -> (i32, i32) {
    %c0_i32 = arith.constant 0 : i32
    %c0_i32_0 = arith.constant 0 : i32
    %c0_i32_1 = arith.constant 0 : i32
    return %c0_i32, %c0_i32_0 : i32, i32
  }
  func.func @transform_2(%arg0: i32) -> (i32, i32) {
    %c0_i32 = arith.constant 0 : i32
    %c0_i32_0 = arith.constant 0 : i32
    %c0_i32_1 = arith.constant 0 : i32
    return %c0_i32, %c0_i32_0 : i32, i32
  }
  func.func @transform_3(%arg0: i32) -> (i32, i32) {
    %c0_i32 = arith.constant 0 : i32
    %c0_i32_0 = arith.constant 0 : i32
    %c0_i32_1 = arith.constant 0 : i32
    return %c0_i32, %c0_i32_0 : i32, i32
  }
  func.func @transform_4(%arg0: i32) -> (i32, i32) {
    %c0_i32 = arith.constant 0 : i32
    %c0_i32_0 = arith.constant 0 : i32
    %c0_i32_1 = arith.constant 0 : i32
    return %c0_i32, %c0_i32_0 : i32, i32
  }
  func.func @transform_5(%arg0: i32) -> (i32, i32) {
    %c0_i32 = arith.constant 0 : i32
    %c0_i32_0 = arith.constant 0 : i32
    return %arg0, %c0_i32 : i32, i32
  }
}

module attributes {stable_mosaic.version = 11 : i64} {
  func.func @_stacked_kernel(%arg0: i32, %arg1: memref<16x128xbf16, #tpu.memory_space<vmem>>, %arg2: memref<128x128xbf16, #tpu.memory_space<vmem>>, %arg3: memref<1x128xf32, #tpu.memory_space<vmem>>, %arg4: memref<128x128xbf16, #tpu.memory_space<vmem>>, %arg5: memref<1x128xf32, #tpu.memory_space<vmem>>, %arg6: memref<16x128xf32, #tpu.memory_space<vmem>>) attributes {dimension_semantics = [#tpu.dimension_semantics<parallel>], iteration_bounds = array<i64: 1>, scalar_prefetch = 0 : i64, scratch_operands = 0 : i64, tpu.core_type = #tpu.core_type<tc>, window_params = [{transform_indices = @transform_0, window_bounds = array<i64: 16, 128>}, {pipeline_mode = #tpu.pipeline_mode<synchronous>, transform_indices = @transform_1, window_bounds = array<i64: 128, 128>}, {pipeline_mode = #tpu.pipeline_mode<synchronous>, transform_indices = @transform_2, window_bounds = array<i64: 1, 128>}, {pipeline_mode = #tpu.pipeline_mode<synchronous>, transform_indices = @transform_3, window_bounds = array<i64: 128, 128>}, {pipeline_mode = #tpu.pipeline_mode<synchronous>, transform_indices = @transform_4, window_bounds = array<i64: 1, 128>}, {transform_indices = @transform_5, window_bounds = array<i64: 16, 128>}]} {
    %c0 = arith.constant 0 : index
    %c0_0 = arith.constant 0 : index
    %0 = vector.load %arg1[%c0, %c0_0] : memref<16x128xbf16, #tpu.memory_space<vmem>>, vector<16x128xbf16>
    %c0_1 = arith.constant 0 : index
    %c0_2 = arith.constant 0 : index
    %1 = vector.load %arg2[%c0_1, %c0_2] : memref<128x128xbf16, #tpu.memory_space<vmem>>, vector<128x128xbf16>
    %c0_3 = arith.constant 0 : index
    %c0_4 = arith.constant 0 : index
    %2 = vector.load %arg3[%c0_3, %c0_4] : memref<1x128xf32, #tpu.memory_space<vmem>>, vector<1x128xf32>
    %cst = arith.constant dense<0.000000e+00> : vector<16x128xf32>
    %3 = tpu.matmul %0, %1, %cst {dimension_numbers = #tpu.dot_dimension_numbers<[1], [0], [0], [1], [0, 0, 1, 1], [], []>} : vector<16x128xbf16>, vector<128x128xbf16>, vector<16x128xf32> -> vector<16x128xf32>
    %4 = vector.broadcast %2 : vector<1x128xf32> to vector<16x128xf32>
    %5 = arith.addf %3, %4 : vector<16x128xf32>
    %6 = math.tanh %5 : vector<16x128xf32>
    %7 = arith.truncf %6 : vector<16x128xf32> to vector<16x128xbf16>
    %c0_5 = arith.constant 0 : index
    %c0_6 = arith.constant 0 : index
    %8 = vector.load %arg4[%c0_5, %c0_6] : memref<128x128xbf16, #tpu.memory_space<vmem>>, vector<128x128xbf16>
    %c0_7 = arith.constant 0 : index
    %c0_8 = arith.constant 0 : index
    %9 = vector.load %arg5[%c0_7, %c0_8] : memref<1x128xf32, #tpu.memory_space<vmem>>, vector<1x128xf32>
    %cst_9 = arith.constant dense<0.000000e+00> : vector<16x128xf32>
    %10 = tpu.matmul %7, %8, %cst_9 {dimension_numbers = #tpu.dot_dimension_numbers<[1], [0], [0], [1], [0, 0, 1, 1], [], []>} : vector<16x128xbf16>, vector<128x128xbf16>, vector<16x128xf32> -> vector<16x128xf32>
    %11 = vector.broadcast %9 : vector<1x128xf32> to vector<16x128xf32>
    %12 = arith.addf %10, %11 : vector<16x128xf32>
    %c0_10 = arith.constant 0 : index
    %c0_11 = arith.constant 0 : index
    %13 = vector.load %arg6[%c0_10, %c0_11] : memref<16x128xf32, #tpu.memory_space<vmem>>, vector<16x128xf32>
    tpu.vector_store %arg6[%c0_10, %c0_11], %12 {strides = array<i32>} : memref<16x128xf32, #tpu.memory_space<vmem>>, vector<16x128xf32>,
    return
  }
  func.func @transform_0(%arg0: i32) -> (i32, i32) {
    %c0_i32 = arith.constant 0 : i32
    %c0_i32_0 = arith.constant 0 : i32
    return %arg0, %c0_i32 : i32, i32
  }
  func.func @transform_1(%arg0: i32) -> (i32, i32) {
    %c0_i32 = arith.constant 0 : i32
    %c0_i32_0 = arith.constant 0 : i32
    %c0_i32_1 = arith.constant 0 : i32
    return %c0_i32, %c0_i32_0 : i32, i32
  }
  func.func @transform_2(%arg0: i32) -> (i32, i32) {
    %c0_i32 = arith.constant 0 : i32
    %c0_i32_0 = arith.constant 0 : i32
    %c0_i32_1 = arith.constant 0 : i32
    return %c0_i32, %c0_i32_0 : i32, i32
  }
  func.func @transform_3(%arg0: i32) -> (i32, i32) {
    %c0_i32 = arith.constant 0 : i32
    %c0_i32_0 = arith.constant 0 : i32
    %c0_i32_1 = arith.constant 0 : i32
    return %c0_i32, %c0_i32_0 : i32, i32
  }
  func.func @transform_4(%arg0: i32) -> (i32, i32) {
    %c0_i32 = arith.constant 0 : i32
    %c0_i32_0 = arith.constant 0 : i32
    %c0_i32_1 = arith.constant 0 : i32
    return %c0_i32, %c0_i32_0 : i32, i32
  }
  func.func @transform_5(%arg0: i32) -> (i32, i32) {
    %c0_i32 = arith.constant 0 : i32
    %c0_i32_0 = arith.constant 0 : i32
    return %arg0, %c0_i32 : i32, i32
  }
}

</mosaic_0001>

<llo_original>
// kernel: tpu_custom_call.1
$region0: #{tpu_custom_call.1}
  #allocation0 [shape = 'u32[]', space=smem, size = 0x4, offset = 0x4, fixed_abs, tag = 'smem constant byte address 0x4 - core index']
  #allocation1 [shape = 'u32[144,128]{1,0:T(1,128)}', space=vmem, size = 0x12000, scoped, tag = 'internal scratch']
  %s0 = inlined_call_operand.hbm [shape: bf16[16,128], index: 0, kind: input, shape index: {}]
  %s1 = inlined_call_operand.hbm [shape: bf16[128,128], index: 1, kind: input, shape index: {}]
  %s2 = inlined_call_operand.vmem [shape: f32[1,128], index: 2, kind: input, shape index: {}]
  %s3 = inlined_call_operand.hbm [shape: bf16[128,128], index: 3, kind: input, shape index: {}]
  %s4 = inlined_call_operand.vmem [shape: f32[1,128], index: 4, kind: input, shape index: {}]
  %s5 = inlined_call_operand.hbm [shape: f32[16,128], index: 5, kind: output, shape index: {}]
  %s6 = sld [smem:[#allocation0]]
  $region42: #{tpu_custom_call.1} parent=0
    _
  %s8 = ssub.s32 1, %s6
  %s9 = scalar_select 0, %s8, %s6
  $region1: #{tpu_custom_call.1} parent=0
    #allocation2 [shape = 'u8[4096]{0}', space=vmem, size = 0x1000, scoped, tag = 'input window, operand 0, single buffered']
    #allocation3 [shape = 's32[1]{0}', space=sflag, size = 0x4, scoped, tag = 'scoped memory for tpu_custom_call.1']
    #allocation4 [shape = 's32[1]{0}', space=sflag, size = 0x4, scoped, tag = 'scoped memory for tpu_custom_call.1']
    #allocation5 [shape = 'u8[32768]{0}', space=vmem, size = 0x8000, scoped, tag = 'input window, operand 1, single buffered']
    #allocation6 [shape = 's32[1]{0}', space=sflag, size = 0x4, scoped, tag = 'scoped memory for tpu_custom_call.1']
    #allocation7 [shape = 'u8[32768]{0}', space=vmem, size = 0x8000, scoped, tag = 'input window, operand 3, single buffered']
    #allocation8 [shape = 'u8[8192]{0}', space=vmem, size = 0x2000, scoped, tag = 'output window, operand 0, single buffered']
    %10 = vsyncpa [#allocation3], 0
    %11 = vsyncpa [#allocation6], 0
    %12 = vsyncpa [#allocation4], 0
    // Predicated region
    $region2: #{tpu_custom_call.1} parent=1 // pred_check
      _
    $region3: #{tpu_custom_call.1} parent=1 // pred_check_branch
      %14 = sbr.rel (0) target = $region5
    $region4: #{tpu_custom_call.1} parent=1 // pred_region
      %s16 = ssub.s32 128, 128
      %17 = vsyncadd [#allocation3], %s16
      %s18 = sshll.u32 [#allocation2], 4
      %s19 = int_to_ptr.vmem [resolvable:$true] %s18
      %24 = dma.hbm_to_vmem [thread:$0]  %s0, 128, %s19, [#allocation3], 64, 64, 4
    $region5: #{tpu_custom_call.1} parent=1 // pred_fallthru
      _
    // Predicated region
    $region6: #{tpu_custom_call.1} parent=1 // pred_check
      _
    $region7: #{tpu_custom_call.1} parent=1 // pred_check_branch
      %26 = sbr.rel (0) target = $region9
    $region8: #{tpu_custom_call.1} parent=1 // pred_region
      %s28 = ssub.s32 1024, 1024
      %29 = vsyncadd [#allocation6], %s28
      %s30 = sshll.u32 [#allocation5], 4
      %s31 = int_to_ptr.vmem [resolvable:$true] %s30
      %36 = dma.hbm_to_vmem [thread:$0]  %s1, 1024, %s31, [#allocation6], 64, 64, 4
    $region9: #{tpu_custom_call.1} parent=1 // pred_fallthru
      _
    // Predicated region
    $region10: #{tpu_custom_call.1} parent=1 // pred_check
      _
    $region11: #{tpu_custom_call.1} parent=1 // pred_check_branch
      %38 = sbr.rel (0) target = $region13
    $region12: #{tpu_custom_call.1} parent=1 // pred_region
      _
    $region13: #{tpu_custom_call.1} parent=1 // pred_fallthru
      _
    // Predicated region
    $region14: #{tpu_custom_call.1} parent=1 // pred_check
      _
    $region15: #{tpu_custom_call.1} parent=1 // pred_check_branch
      %40 = sbr.rel (0) target = $region17
    $region16: #{tpu_custom_call.1} parent=1 // pred_region
      %s42 = ssub.s32 1024, 1024
      %43 = vsyncadd [#allocation6], %s42
      %s44 = sshll.u32 [#allocation7], 4
      %s45 = int_to_ptr.vmem [resolvable:$true] %s44
      %50 = dma.hbm_to_vmem [thread:$0]  %s3, 1024, %s45, [#allocation6], 64, 64, 4
    $region17: #{tpu_custom_call.1} parent=1 // pred_fallthru
      _
    // Predicated region
    $region18: #{tpu_custom_call.1} parent=1 // pred_check
      _
    $region19: #{tpu_custom_call.1} parent=1 // pred_check_branch
      %52 = sbr.rel (0) target = $region21
    $region20: #{tpu_custom_call.1} parent=1 // pred_region
      _
    $region21: #{tpu_custom_call.1} parent=1 // pred_fallthru
      _
    // Predicated region
    $region22: #{tpu_custom_call.1} parent=1 // pred_check
      _
    $region23: #{tpu_custom_call.1} parent=1 // pred_check_branch
      %54 = sbr.rel (0) target = $region25
    $region24: #{tpu_custom_call.1} parent=1 // pred_region
      %55 = dma.done [#allocation3], 128
    $region25: #{tpu_custom_call.1} parent=1 // pred_fallthru
      _
    // Predicated region
    $region26: #{tpu_custom_call.1} parent=1 // pred_check
      _
    $region27: #{tpu_custom_call.1} parent=1 // pred_check_branch
      %57 = sbr.rel (0) target = $region29
    $region28: #{tpu_custom_call.1} parent=1 // pred_region
      %58 = dma.done [#allocation6], 1024
    $region29: #{tpu_custom_call.1} parent=1 // pred_fallthru
      _
    // Predicated region
    $region30: #{tpu_custom_call.1} parent=1 // pred_check
      _
    $region31: #{tpu_custom_call.1} parent=1 // pred_check_branch
      %60 = sbr.rel (0) target = $region33
    $region32: #{tpu_custom_call.1} parent=1 // pred_region
      %61 = dma.done [#allocation6], 1024
    $region33: #{tpu_custom_call.1} parent=1 // pred_fallthru
      _
    %v63 = vld [vmem:[#allocation2] sm:$0xf]
    %v64 = vld [vmem:[#allocation2 + $0x4] sm:$0xf]
    %v65 = vld [vmem:[#allocation5] sm:$0xf]
    %v66 = vld [vmem:[#allocation5 + $0x4] sm:$0xf]
    %v67 = vld [vmem:[#allocation5 + $0x8] sm:$0xf]
    %v68 = vld [vmem:[#allocation5 + $0xc] sm:$0xf]
    %v69 = vld [vmem:[#allocation5 + $0x10] sm:$0xf]
    %v70 = vld [vmem:[#allocation5 + $0x14] sm:$0xf]
    %v71 = vld [vmem:[#allocation5 + $0x18] sm:$0xf]
    %v72 = vld [vmem:[#allocation5 + $0x1c] sm:$0xf]
    %v73 = vld [vmem:[#allocation5 + $0x20] sm:$0xf]
    %v74 = vld [vmem:[#allocation5 + $0x24] sm:$0xf]
    %v75 = vld [vmem:[#allocation5 + $0x28] sm:$0xf]
    %v76 = vld [vmem:[#allocation5 + $0x2c] sm:$0xf]
    %v77 = vld [vmem:[#allocation5 + $0x30] sm:$0xf]
    %v78 = vld [vmem:[#allocation5 + $0x34] sm:$0xf]
    %v79 = vld [vmem:[#allocation5 + $0x38] sm:$0xf]
    %v80 = vld [vmem:[#allocation5 + $0x3c] sm:$0xf]
    %v81 = vld [vmem:[%s2] sm:$0x1]
    %v83 = vlaneseq
    %v84 = vshrl.u32 %v83, 7
    %v85 = vsub.s32 0, %v84
    %v86 = vrot.slane %v81, %v85
    %v90 = vunpack.c.l.b16 %v63
    %v91 = vunpack.c.l.b16 %v64
    %v92 = vpack.c.b16 %v91, %v90
    %v110 = vunpack.c.l.b16 %v65
    %v111 = vunpack.c.l.b16 %v66
    %v112 = vunpack.c.l.b16 %v67
    %v113 = vunpack.c.l.b16 %v68
    %v114 = vunpack.c.l.b16 %v69
    %v115 = vunpack.c.l.b16 %v70
    %v116 = vunpack.c.l.b16 %v71
    %v117 = vunpack.c.l.b16 %v72
    %v118 = vunpack.c.l.b16 %v73
    %v119 = vunpack.c.l.b16 %v74
    %v120 = vunpack.c.l.b16 %v75
    %v121 = vunpack.c.l.b16 %v76
    %v122 = vunpack.c.l.b16 %v77
    %v123 = vunpack.c.l.b16 %v78
    %v124 = vunpack.c.l.b16 %v79
    %v125 = vunpack.c.l.b16 %v80
    %v126 = vpack.c.b16 %v111, %v110
    %v127 = vpack.c.b16 %v113, %v112
    %v128 = vpack.c.b16 %v115, %v114
    %v129 = vpack.c.b16 %v117, %v116
    %v130 = vpack.c.b16 %v119, %v118
    %v131 = vpack.c.b16 %v121, %v120
    %v132 = vpack.c.b16 %v123, %v122
    %v133 = vpack.c.b16 %v125, %v124
    %142 = vmatprep.subr.bf16.mxu0 0
    %143 = vmatpush1.bf16.msra.mxu0 %v126
    %144 = vmatprep.subr.bf16.mxu0 0
    %145 = vmatpush1.bf16.msra.mxu0 %v127
    %146 = vmatprep.subr.bf16.mxu0 0
    %147 = vmatpush1.bf16.msra.mxu0 %v128
    %148 = vmatprep.subr.bf16.mxu0 0
    %149 = vmatpush1.bf16.msra.mxu0 %v129
    %150 = vmatprep.subr.bf16.mxu0 0
    %151 = vmatpush1.bf16.msra.mxu0 %v130
    %152 = vmatprep.subr.bf16.mxu0 0
    %153 = vmatpush1.bf16.msra.mxu0 %v131
    %154 = vmatprep.subr.bf16.mxu0 0
    %155 = vmatpush1.bf16.msra.mxu0 %v132
    %156 = vmatprep.subr.bf16.mxu0 0
    %157 = vmatpush1.bf16.msra.mxu0 %v133
    %158 = vmatprep.subr.bf16.mxu0 0
    %159 = vmatpush1.bf16.msra.mxu0 0
    %160 = vmatprep.subr.bf16.mxu0 0
    %161 = vmatpush1.bf16.msra.mxu0 0
    %162 = vmatprep.subr.bf16.mxu0 0
    %163 = vmatpush1.bf16.msra.mxu0 0
    %164 = vmatprep.subr.bf16.mxu0 0
    %165 = vmatpush1.bf16.msra.mxu0 0
    %166 = vmatprep.subr.bf16.mxu0 0
    %167 = vmatpush1.bf16.msra.mxu0 0
    %168 = vmatprep.subr.bf16.mxu0 0
    %169 = vmatpush1.bf16.msra.mxu0 0
    %170 = vmatprep.subr.bf16.mxu0 0
    %171 = vmatpush1.bf16.msra.mxu0 0
    %172 = vmatprep.subr.bf16.mxu0 0
    %173 = vmatpush1.bf16.msra.mxu0 0
    %174 = vmatprep.mubr.bf16.mxu0 0
    %175 = vmatmul.mubr.bf16.gmra.mrb[0].mxu0 %v92
    %v176 = vpop.f32.mrb[0].mxu0
    %v177 = vadd.f32 %v86, %v176
    %v178 = vpop.f32.mrb[0].mxu0
    %v179 = vpop.f32.mrb[0].mxu0
    %v180 = vadd.f32 %v86, %v179
    %v181 = vpop.f32.mrb[0].mxu0
    %182 = vdwg.mxu0
    %v183 = vtanh.pop %v177
    %v184 = vtanh.pop %v180
    %v185 = vpack.c.bf16 %v184, %v183
    %v186 = vld [vmem:[#allocation7] sm:$0xf]
    %v187 = vld [vmem:[#allocation7 + $0x4] sm:$0xf]
    %v188 = vld [vmem:[#allocation7 + $0x8] sm:$0xf]
    %v189 = vld [vmem:[#allocation7 + $0xc] sm:$0xf]
    %v190 = vld [vmem:[#allocation7 + $0x10] sm:$0xf]
    %v191 = vld [vmem:[#allocation7 + $0x14] sm:$0xf]
    %v192 = vld [vmem:[#allocation7 + $0x18] sm:$0xf]
    %v193 = vld [vmem:[#allocation7 + $0x1c] sm:$0xf]
    %v194 = vld [vmem:[#allocation7 + $0x20] sm:$0xf]
    %v195 = vld [vmem:[#allocation7 + $0x24] sm:$0xf]
    %v196 = vld [vmem:[#allocation7 + $0x28] sm:$0xf]
    %v197 = vld [vmem:[#allocation7 + $0x2c] sm:$0xf]
    %v198 = vld [vmem:[#allocation7 + $0x30] sm:$0xf]
    %v199 = vld [vmem:[#allocation7 + $0x34] sm:$0xf]
    %v200 = vld [vmem:[#allocation7 + $0x38] sm:$0xf]
    %v201 = vld [vmem:[#allocation7 + $0x3c] sm:$0xf]
    %v202 = vld [vmem:[%s4] sm:$0x1]
    %v204 = vlaneseq
    %v205 = vshrl.u32 %v204, 7
    %v206 = vsub.s32 0, %v205
    %v207 = vrot.slane %v202, %v206
    %v225 = vunpack.c.l.b16 %v186
    %v226 = vunpack.c.l.b16 %v187
    %v227 = vunpack.c.l.b16 %v188
    %v228 = vunpack.c.l.b16 %v189
    %v229 = vunpack.c.l.b16 %v190
    %v230 = vunpack.c.l.b16 %v191
    %v231 = vunpack.c.l.b16 %v192
    %v232 = vunpack.c.l.b16 %v193
    %v233 = vunpack.c.l.b16 %v194
    %v234 = vunpack.c.l.b16 %v195
    %v235 = vunpack.c.l.b16 %v196
    %v236 = vunpack.c.l.b16 %v197
    %v237 = vunpack.c.l.b16 %v198
    %v238 = vunpack.c.l.b16 %v199
    %v239 = vunpack.c.l.b16 %v200
    %v240 = vunpack.c.l.b16 %v201
    %v241 = vpack.c.b16 %v226, %v225
    %v242 = vpack.c.b16 %v228, %v227
    %v243 = vpack.c.b16 %v230, %v229
    %v244 = vpack.c.b16 %v232, %v231
    %v245 = vpack.c.b16 %v234, %v233
    %v246 = vpack.c.b16 %v236, %v235
    %v247 = vpack.c.b16 %v238, %v237
    %v248 = vpack.c.b16 %v240, %v239
    %257 = vmatprep.subr.bf16.mxu0 0
    %258 = vmatpush1.bf16.msra.mxu0 %v241
    %259 = vmatprep.subr.bf16.mxu0 0
    %260 = vmatpush1.bf16.msra.mxu0 %v242
    %261 = vmatprep.subr.bf16.mxu0 0
    %262 = vmatpush1.bf16.msra.mxu0 %v243
    %263 = vmatprep.subr.bf16.mxu0 0
    %264 = vmatpush1.bf16.msra.mxu0 %v244
    %265 = vmatprep.subr.bf16.mxu0 0
    %266 = vmatpush1.bf16.msra.mxu0 %v245
    %267 = vmatprep.subr.bf16.mxu0 0
    %268 = vmatpush1.bf16.msra.mxu0 %v246
    %269 = vmatprep.subr.bf16.mxu0 0
    %270 = vmatpush1.bf16.msra.mxu0 %v247
    %271 = vmatprep.subr.bf16.mxu0 0
    %272 = vmatpush1.bf16.msra.mxu0 %v248
    %273 = vmatprep.subr.bf16.mxu0 0
    %274 = vmatpush1.bf16.msra.mxu0 0
    %275 = vmatprep.subr.bf16.mxu0 0
    %276 = vmatpush1.bf16.msra.mxu0 0
    %277 = vmatprep.subr.bf16.mxu0 0
    %278 = vmatpush1.bf16.msra.mxu0 0
    %279 = vmatprep.subr.bf16.mxu0 0
    %280 = vmatpush1.bf16.msra.mxu0 0
    %281 = vmatprep.subr.bf16.mxu0 0
    %282 = vmatpush1.bf16.msra.mxu0 0
    %283 = vmatprep.subr.bf16.mxu0 0
    %284 = vmatpush1.bf16.msra.mxu0 0
    %285 = vmatprep.subr.bf16.mxu0 0
    %286 = vmatpush1.bf16.msra.mxu0 0
    %287 = vmatprep.subr.bf16.mxu0 0
    %288 = vmatpush1.bf16.msra.mxu0 0
    %289 = vmatprep.mubr.bf16.mxu0 0
    %290 = vmatmul.mubr.bf16.gmra.mrb[0].mxu0 %v185
    %v291 = vpop.f32.mrb[0].mxu0
    %v292 = vadd.f32 %v207, %v291
    %v293 = vpop.f32.mrb[0].mxu0
    %v294 = vpop.f32.mrb[0].mxu0
    %v295 = vadd.f32 %v207, %v294
    %v296 = vpop.f32.mrb[0].mxu0
    %297 = vdwg.mxu0
    %298 = vst [vmem:[#allocation8] sm:$0xff] %v292
    %299 = vst [vmem:[#allocation8 + $0x8] sm:$0xff] %v295
    // Predicated region
    $region34: #{tpu_custom_call.1} parent=1 // pred_check
      _
    $region35: #{tpu_custom_call.1} parent=1 // pred_check_branch
      %301 = sbr.rel (0) target = $region37
    $region36: #{tpu_custom_call.1} parent=1 // pred_region
      %s303 = ssub.s32 256, 256
      %304 = vsyncadd [#allocation4], %s303
      %s305 = sshll.u32 [#allocation8], 4
      %s306 = int_to_ptr.vmem [resolvable:$true] %s305
      %311 = dma.vmem_to_hbm [thread:$0]  %s306, 256, %s5, [#allocation4], 128, 128, 8
    $region37: #{tpu_custom_call.1} parent=1 // pred_fallthru
      _
    // Predicated region
    $region38: #{tpu_custom_call.1} parent=1 // pred_check
      _
    $region39: #{tpu_custom_call.1} parent=1 // pred_check_branch
      %313 = sbr.rel (0) target = $region41
    $region40: #{tpu_custom_call.1} parent=1 // pred_region
      %314 = dma.done [#allocation4], 256
    $region41: #{tpu_custom_call.1} parent=1 // pred_fallthru
      _
    %315 = vsyncpa [#allocation3], 1
    %316 = vsyncpa [#allocation6], 1
    %317 = vsyncpa [#allocation4], 1

// kernel: tpu_custom_call.1
$region0: #{tpu_custom_call.1}
  #allocation0 [shape = 'u32[]', space=smem, size = 0x4, offset = 0x4, fixed_abs, tag = 'smem constant byte address 0x4 - core index']
  #allocation1 [shape = 'u32[144,128]{1,0:T(1,128)}', space=vmem, size = 0x12000, scoped, tag = 'internal scratch']
  %s0 = inlined_call_operand.hbm [shape: bf16[16,128], index: 0, kind: input, shape index: {}]
  %s1 = inlined_call_operand.hbm [shape: bf16[128,128], index: 1, kind: input, shape index: {}]
  %s2 = inlined_call_operand.vmem [shape: f32[1,128], index: 2, kind: input, shape index: {}]
  %s3 = inlined_call_operand.hbm [shape: bf16[128,128], index: 3, kind: input, shape index: {}]
  %s4 = inlined_call_operand.vmem [shape: f32[1,128], index: 4, kind: input, shape index: {}]
  %s5 = inlined_call_operand.hbm [shape: f32[16,128], index: 5, kind: output, shape index: {}]
  %s6 = sld [smem:[#allocation0]]
  $region42: #{tpu_custom_call.1} parent=0
    _
  %s8 = ssub.s32 1, %s6
  %s9 = scalar_select 0, %s8, %s6
  $region1: #{tpu_custom_call.1} parent=0
    #allocation2 [shape = 'u8[4096]{0}', space=vmem, size = 0x1000, scoped, tag = 'input window, operand 0, single buffered']
    #allocation3 [shape = 's32[1]{0}', space=sflag, size = 0x4, scoped, tag = 'scoped memory for tpu_custom_call.1']
    #allocation4 [shape = 's32[1]{0}', space=sflag, size = 0x4, scoped, tag = 'scoped memory for tpu_custom_call.1']
    #allocation5 [shape = 'u8[32768]{0}', space=vmem, size = 0x8000, scoped, tag = 'input window, operand 1, single buffered']
    #allocation6 [shape = 's32[1]{0}', space=sflag, size = 0x4, scoped, tag = 'scoped memory for tpu_custom_call.1']
    #allocation7 [shape = 'u8[32768]{0}', space=vmem, size = 0x8000, scoped, tag = 'input window, operand 3, single buffered']
    #allocation8 [shape = 'u8[8192]{0}', space=vmem, size = 0x2000, scoped, tag = 'output window, operand 0, single buffered']
    %10 = vsyncpa [#allocation3], 0
    %11 = vsyncpa [#allocation6], 0
    %12 = vsyncpa [#allocation4], 0
    // Predicated region
    $region2: #{tpu_custom_call.1} parent=1 // pred_check
      _
    $region3: #{tpu_custom_call.1} parent=1 // pred_check_branch
      %14 = sbr.rel (0) target = $region5
    $region4: #{tpu_custom_call.1} parent=1 // pred_region
      %s16 = ssub.s32 128, 128
      %17 = vsyncadd [#allocation3], %s16
      %s18 = sshll.u32 [#allocation2], 4
      %s19 = int_to_ptr.vmem [resolvable:$true] %s18
      %24 = dma.hbm_to_vmem [thread:$0]  %s0, 128, %s19, [#allocation3], 64, 64, 4
    $region5: #{tpu_custom_call.1} parent=1 // pred_fallthru
      _
    // Predicated region
    $region6: #{tpu_custom_call.1} parent=1 // pred_check
      _
    $region7: #{tpu_custom_call.1} parent=1 // pred_check_branch
      %26 = sbr.rel (0) target = $region9
    $region8: #{tpu_custom_call.1} parent=1 // pred_region
      %s28 = ssub.s32 1024, 1024
      %29 = vsyncadd [#allocation6], %s28
      %s30 = sshll.u32 [#allocation5], 4
      %s31 = int_to_ptr.vmem [resolvable:$true] %s30
      %36 = dma.hbm_to_vmem [thread:$0]  %s1, 1024, %s31, [#allocation6], 64, 64, 4
    $region9: #{tpu_custom_call.1} parent=1 // pred_fallthru
      _
    // Predicated region
    $region10: #{tpu_custom_call.1} parent=1 // pred_check
      _
    $region11: #{tpu_custom_call.1} parent=1 // pred_check_branch
      %38 = sbr.rel (0) target = $region13
    $region12: #{tpu_custom_call.1} parent=1 // pred_region
      _
    $region13: #{tpu_custom_call.1} parent=1 // pred_fallthru
      _
    // Predicated region
    $region14: #{tpu_custom_call.1} parent=1 // pred_check
      _
    $region15: #{tpu_custom_call.1} parent=1 // pred_check_branch
      %40 = sbr.rel (0) target = $region17
    $region16: #{tpu_custom_call.1} parent=1 // pred_region
      %s42 = ssub.s32 1024, 1024
      %43 = vsyncadd [#allocation6], %s42
      %s44 = sshll.u32 [#allocation7], 4
      %s45 = int_to_ptr.vmem [resolvable:$true] %s44
      %50 = dma.hbm_to_vmem [thread:$0]  %s3, 1024, %s45, [#allocation6], 64, 64, 4
    $region17: #{tpu_custom_call.1} parent=1 // pred_fallthru
      _
    // Predicated region
    $region18: #{tpu_custom_call.1} parent=1 // pred_check
      _
    $region19: #{tpu_custom_call.1} parent=1 // pred_check_branch
      %52 = sbr.rel (0) target = $region21
    $region20: #{tpu_custom_call.1} parent=1 // pred_region
      _
    $region21: #{tpu_custom_call.1} parent=1 // pred_fallthru
      _
    // Predicated region
    $region22: #{tpu_custom_call.1} parent=1 // pred_check
      _
    $region23: #{tpu_custom_call.1} parent=1 // pred_check_branch
      %54 = sbr.rel (0) target = $region25
    $region24: #{tpu_custom_call.1} parent=1 // pred_region
      %55 = dma.done [#allocation3], 128
    $region25: #{tpu_custom_call.1} parent=1 // pred_fallthru
      _
    // Predicated region
    $region26: #{tpu_custom_call.1} parent=1 // pred_check
      _
    $region27: #{tpu_custom_call.1} parent=1 // pred_check_branch
      %57 = sbr.rel (0) target = $region29
    $region28: #{tpu_custom_call.1} parent=1 // pred_region
      %58 = dma.done [#allocation6], 1024
    $region29: #{tpu_custom_call.1} parent=1 // pred_fallthru
      _
    // Predicated region
    $region30: #{tpu_custom_call.1} parent=1 // pred_check
      _
    $region31: #{tpu_custom_call.1} parent=1 // pred_check_branch
      %60 = sbr.rel (0) target = $region33
    $region32: #{tpu_custom_call.1} parent=1 // pred_region
      %61 = dma.done [#allocation6], 1024
    $region33: #{tpu_custom_call.1} parent=1 // pred_fallthru
      _
    %v63 = vld [vmem:[#allocation2] sm:$0xf]
    %v64 = vld [vmem:[#allocation2 + $0x4] sm:$0xf]
    %v65 = vld [vmem:[#allocation5] sm:$0xf]
    %v66 = vld [vmem:[#allocation5 + $0x4] sm:$0xf]
    %v67 = vld [vmem:[#allocation5 + $0x8] sm:$0xf]
    %v68 = vld [vmem:[#allocation5 + $0xc] sm:$0xf]
    %v69 = vld [vmem:[#allocation5 + $0x10] sm:$0xf]
    %v70 = vld [vmem:[#allocation5 + $0x14] sm:$0xf]
    %v71 = vld [vmem:[#allocation5 + $0x18] sm:$0xf]
    %v72 = vld [vmem:[#allocation5 + $0x1c] sm:$0xf]
    %v73 = vld [vmem:[#allocation5 + $0x20] sm:$0xf]
    %v74 = vld [vmem:[#allocation5 + $0x24] sm:$0xf]
    %v75 = vld [vmem:[#allocation5 + $0x28] sm:$0xf]
    %v76 = vld [vmem:[#allocation5 + $0x2c] sm:$0xf]
    %v77 = vld [vmem:[#allocation5 + $0x30] sm:$0xf]
    %v78 = vld [vmem:[#allocation5 + $0x34] sm:$0xf]
    %v79 = vld [vmem:[#allocation5 + $0x38] sm:$0xf]
    %v80 = vld [vmem:[#allocation5 + $0x3c] sm:$0xf]
    %v81 = vld [vmem:[%s2] sm:$0x1]
    %v83 = vlaneseq
    %v84 = vshrl.u32 %v83, 7
    %v85 = vsub.s32 0, %v84
    %v86 = vrot.slane %v81, %v85
    %v90 = vunpack.c.l.b16 %v63
    %v91 = vunpack.c.l.b16 %v64
    %v92 = vpack.c.b16 %v91, %v90
    %v110 = vunpack.c.l.b16 %v65
    %v111 = vunpack.c.l.b16 %v66
    %v112 = vunpack.c.l.b16 %v67
    %v113 = vunpack.c.l.b16 %v68
    %v114 = vunpack.c.l.b16 %v69
    %v115 = vunpack.c.l.b16 %v70
    %v116 = vunpack.c.l.b16 %v71
    %v117 = vunpack.c.l.b16 %v72
    %v118 = vunpack.c.l.b16 %v73
    %v119 = vunpack.c.l.b16 %v74
    %v120 = vunpack.c.l.b16 %v75
    %v121 = vunpack.c.l.b16 %v76
    %v122 = vunpack.c.l.b16 %v77
    %v123 = vunpack.c.l.b16 %v78
    %v124 = vunpack.c.l.b16 %v79
    %v125 = vunpack.c.l.b16 %v80
    %v126 = vpack.c.b16 %v111, %v110
    %v127 = vpack.c.b16 %v113, %v112
    %v128 = vpack.c.b16 %v115, %v114
    %v129 = vpack.c.b16 %v117, %v116
    %v130 = vpack.c.b16 %v119, %v118
    %v131 = vpack.c.b16 %v121, %v120
    %v132 = vpack.c.b16 %v123, %v122
    %v133 = vpack.c.b16 %v125, %v124
    %142 = vmatprep.subr.bf16.mxu0 0
    %143 = vmatpush1.bf16.msra.mxu0 %v126
    %144 = vmatprep.subr.bf16.mxu0 0
    %145 = vmatpush1.bf16.msra.mxu0 %v127
    %146 = vmatprep.subr.bf16.mxu0 0
    %147 = vmatpush1.bf16.msra.mxu0 %v128
    %148 = vmatprep.subr.bf16.mxu0 0
    %149 = vmatpush1.bf16.msra.mxu0 %v129
    %150 = vmatprep.subr.bf16.mxu0 0
    %151 = vmatpush1.bf16.msra.mxu0 %v130
    %152 = vmatprep.subr.bf16.mxu0 0
    %153 = vmatpush1.bf16.msra.mxu0 %v131
    %154 = vmatprep.subr.bf16.mxu0 0
    %155 = vmatpush1.bf16.msra.mxu0 %v132
    %156 = vmatprep.subr.bf16.mxu0 0
    %157 = vmatpush1.bf16.msra.mxu0 %v133
    %158 = vmatprep.subr.bf16.mxu0 0
    %159 = vmatpush1.bf16.msra.mxu0 0
    %160 = vmatprep.subr.bf16.mxu0 0
    %161 = vmatpush1.bf16.msra.mxu0 0
    %162 = vmatprep.subr.bf16.mxu0 0
    %163 = vmatpush1.bf16.msra.mxu0 0
    %164 = vmatprep.subr.bf16.mxu0 0
    %165 = vmatpush1.bf16.msra.mxu0 0
    %166 = vmatprep.subr.bf16.mxu0 0
    %167 = vmatpush1.bf16.msra.mxu0 0
    %168 = vmatprep.subr.bf16.mxu0 0
    %169 = vmatpush1.bf16.msra.mxu0 0
    %170 = vmatprep.subr.bf16.mxu0 0
    %171 = vmatpush1.bf16.msra.mxu0 0
    %172 = vmatprep.subr.bf16.mxu0 0
    %173 = vmatpush1.bf16.msra.mxu0 0
    %174 = vmatprep.mubr.bf16.mxu0 0
    %175 = vmatmul.mubr.bf16.gmra.mrb[0].mxu0 %v92
    %v176 = vpop.f32.mrb[0].mxu0
    %v177 = vadd.f32 %v86, %v176
    %v178 = vpop.f32.mrb[0].mxu0
    %v179 = vpop.f32.mrb[0].mxu0
    %v180 = vadd.f32 %v86, %v179
    %v181 = vpop.f32.mrb[0].mxu0
    %182 = vdwg.mxu0
    %v183 = vtanh.pop %v177
    %v184 = vtanh.pop %v180
    %v185 = vpack.c.bf16 %v184, %v183
    %v186 = vld [vmem:[#allocation7] sm:$0xf]
    %v187 = vld [vmem:[#allocation7 + $0x4] sm:$0xf]
    %v188 = vld [vmem:[#allocation7 + $0x8] sm:$0xf]
    %v189 = vld [vmem:[#allocation7 + $0xc] sm:$0xf]
    %v190 = vld [vmem:[#allocation7 + $0x10] sm:$0xf]
    %v191 = vld [vmem:[#allocation7 + $0x14] sm:$0xf]
    %v192 = vld [vmem:[#allocation7 + $0x18] sm:$0xf]
    %v193 = vld [vmem:[#allocation7 + $0x1c] sm:$0xf]
    %v194 = vld [vmem:[#allocation7 + $0x20] sm:$0xf]
    %v195 = vld [vmem:[#allocation7 + $0x24] sm:$0xf]
    %v196 = vld [vmem:[#allocation7 + $0x28] sm:$0xf]
    %v197 = vld [vmem:[#allocation7 + $0x2c] sm:$0xf]
    %v198 = vld [vmem:[#allocation7 + $0x30] sm:$0xf]
    %v199 = vld [vmem:[#allocation7 + $0x34] sm:$0xf]
    %v200 = vld [vmem:[#allocation7 + $0x38] sm:$0xf]
    %v201 = vld [vmem:[#allocation7 + $0x3c] sm:$0xf]
    %v202 = vld [vmem:[%s4] sm:$0x1]
    %v204 = vlaneseq
    %v205 = vshrl.u32 %v204, 7
    %v206 = vsub.s32 0, %v205
    %v207 = vrot.slane %v202, %v206
    %v225 = vunpack.c.l.b16 %v186
    %v226 = vunpack.c.l.b16 %v187
    %v227 = vunpack.c.l.b16 %v188
    %v228 = vunpack.c.l.b16 %v189
    %v229 = vunpack.c.l.b16 %v190
    %v230 = vunpack.c.l.b16 %v191
    %v231 = vunpack.c.l.b16 %v192
    %v232 = vunpack.c.l.b16 %v193
    %v233 = vunpack.c.l.b16 %v194
    %v234 = vunpack.c.l.b16 %v195
    %v235 = vunpack.c.l.b16 %v196
    %v236 = vunpack.c.l.b16 %v197
    %v237 = vunpack.c.l.b16 %v198
    %v238 = vunpack.c.l.b16 %v199
    %v239 = vunpack.c.l.b16 %v200
    %v240 = vunpack.c.l.b16 %v201
    %v241 = vpack.c.b16 %v226, %v225
    %v242 = vpack.c.b16 %v228, %v227
    %v243 = vpack.c.b16 %v230, %v229
    %v244 = vpack.c.b16 %v232, %v231
    %v245 = vpack.c.b16 %v234, %v233
    %v246 = vpack.c.b16 %v236, %v235
    %v247 = vpack.c.b16 %v238, %v237
    %v248 = vpack.c.b16 %v240, %v239
    %257 = vmatprep.subr.bf16.mxu0 0
    %258 = vmatpush1.bf16.msra.mxu0 %v241
    %259 = vmatprep.subr.bf16.mxu0 0
    %260 = vmatpush1.bf16.msra.mxu0 %v242
    %261 = vmatprep.subr.bf16.mxu0 0
    %262 = vmatpush1.bf16.msra.mxu0 %v243
    %263 = vmatprep.subr.bf16.mxu0 0
    %264 = vmatpush1.bf16.msra.mxu0 %v244
    %265 = vmatprep.subr.bf16.mxu0 0
    %266 = vmatpush1.bf16.msra.mxu0 %v245
    %267 = vmatprep.subr.bf16.mxu0 0
    %268 = vmatpush1.bf16.msra.mxu0 %v246
    %269 = vmatprep.subr.bf16.mxu0 0
    %270 = vmatpush1.bf16.msra.mxu0 %v247
    %271 = vmatprep.subr.bf16.mxu0 0
    %272 = vmatpush1.bf16.msra.mxu0 %v248
    %273 = vmatprep.subr.bf16.mxu0 0
    %274 = vmatpush1.bf16.msra.mxu0 0
    %275 = vmatprep.subr.bf16.mxu0 0
    %276 = vmatpush1.bf16.msra.mxu0 0
    %277 = vmatprep.subr.bf16.mxu0 0
    %278 = vmatpush1.bf16.msra.mxu0 0
    %279 = vmatprep.subr.bf16.mxu0 0
    %280 = vmatpush1.bf16.msra.mxu0 0
    %281 = vmatprep.subr.bf16.mxu0 0
    %282 = vmatpush1.bf16.msra.mxu0 0
    %283 = vmatprep.subr.bf16.mxu0 0
    %284 = vmatpush1.bf16.msra.mxu0 0
    %285 = vmatprep.subr.bf16.mxu0 0
    %286 = vmatpush1.bf16.msra.mxu0 0
    %287 = vmatprep.subr.bf16.mxu0 0
    %288 = vmatpush1.bf16.msra.mxu0 0
    %289 = vmatprep.mubr.bf16.mxu0 0
    %290 = vmatmul.mubr.bf16.gmra.mrb[0].mxu0 %v185
    %v291 = vpop.f32.mrb[0].mxu0
    %v292 = vadd.f32 %v207, %v291
    %v293 = vpop.f32.mrb[0].mxu0
    %v294 = vpop.f32.mrb[0].mxu0
    %v295 = vadd.f32 %v207, %v294
    %v296 = vpop.f32.mrb[0].mxu0
    %297 = vdwg.mxu0
    %298 = vst [vmem:[#allocation8] sm:$0xff] %v292
    %299 = vst [vmem:[#allocation8 + $0x8] sm:$0xff] %v295
    // Predicated region
    $region34: #{tpu_custom_call.1} parent=1 // pred_check
      _
    $region35: #{tpu_custom_call.1} parent=1 // pred_check_branch
      %301 = sbr.rel (0) target = $region37
    $region36: #{tpu_custom_call.1} parent=1 // pred_region
      %s303 = ssub.s32 256, 256
      %304 = vsyncadd [#allocation4], %s303
      %s305 = sshll.u32 [#allocation8], 4
      %s306 = int_to_ptr.vmem [resolvable:$true] %s305
      %311 = dma.vmem_to_hbm [thread:$0]  %s306, 256, %s5, [#allocation4], 128, 128, 8
    $region37: #{tpu_custom_call.1} parent=1 // pred_fallthru
      _
    // Predicated region
    $region38: #{tpu_custom_call.1} parent=1 // pred_check
      _
    $region39: #{tpu_custom_call.1} parent=1 // pred_check_branch
      %313 = sbr.rel (0) target = $region41
    $region40: #{tpu_custom_call.1} parent=1 // pred_region
      %314 = dma.done [#allocation4], 256
    $region41: #{tpu_custom_call.1} parent=1 // pred_fallthru
      _
    %315 = vsyncpa [#allocation3], 1
    %316 = vsyncpa [#allocation6], 1
    %317 = vsyncpa [#allocation4], 1

</llo_original>
